<compile_context>
chip_gen: v5e
topology: v5e:2x2
jax: 0.10.0
libtpu: 0.0.40
codegen_flags: <defaults>
</compile_context>

<pallas_src>
import functools

import jax
import jax.numpy as jnp
from jax import lax
from jax.experimental import pallas as pl
from jax.experimental.pallas import tpu as pltpu


# ----------------------------------------------------------------------------
# Kernel: one fused matmul + bias + activation.
# ----------------------------------------------------------------------------
def _conv2d_block_kernel(lhs_ref, rhs_ref, b_ref, o_ref, *, activation):
    """lhs_ref: (M_tile, KH*Wp*Cin), rhs_ref: (KH*Wp*Cin, Ncols_pad),
    b_ref: (1, Ncols_pad), o_ref: (M_tile, Ncols_pad)."""
    acc = jnp.dot(lhs_ref[...], rhs_ref[...],
                  preferred_element_type=jnp.float32)
    acc = acc + b_ref[...]                       # bias fused into the epilogue

    if activation == "relu":
        acc = jnp.maximum(acc, 0.0)
    elif activation == "lrelu":
        acc = jnp.where(acc >= 0.0, acc, 0.2 * acc)
    elif activation == "tanh":
        acc = jnp.tanh(acc)
    elif activation == "none":
        pass
    else:
        # TODO(synk): 'prelu'/'selu' activations not implemented here.
        raise NotImplementedError(activation)

    o_ref[...] = acc.astype(o_ref.dtype)


# ----------------------------------------------------------------------------
# One-time (per weight update) parameter preparation.
# ----------------------------------------------------------------------------
def build_conv2d_block_params(w_oihw, b, *, input_hw, stride=1, padding=1,
                              norm="none", pad_type="zero"):
    """Precompute the Toeplitz-expanded RHS and the tiled bias row.

    Call this once per weight update (NOT per forward call) and pass the
    results to `conv2d_block_apply`.
    """
    assert pad_type == "zero"
    # TODO(synk): 'reflect'/'replicate' padding not implemented.
    assert norm == "none"
    # TODO(synk): 'bn'/'in'/'ln'/'adain'/'sn' norm variants not implemented.

    Cout, Cin, KH, KW = w_oihw.shape
    H, W = input_hw
    Wp = W + 2 * padding
    Wo = (Wp - KW) // stride + 1
    Ncols = Wo * Cout
    Ncols_pad = ((Ncols + 127) // 128) * 128     # keep stores unmasked

    # rhs[(kh, wp, ci), (wo, co)] = w[co, ci, kh, wp - wo*stride]
    #                               if 0 <= wp - wo*stride < KW else 0
    # Built with a single vectorized gather (no dynamic-update-slice loop).
    w_t = jnp.transpose(w_oihw, (2, 3, 1, 0))                  # (KH, KW, Cin, Cout)
    kw = jnp.arange(Wp)[:, None] - jnp.arange(Wo)[None, :] * stride   # (Wp, Wo)
    valid = (kw >= 0) & (kw < KW)
    kw_c = jnp.clip(kw, 0, KW - 1)
    g = w_t[:, kw_c, :, :]                                     # (KH, Wp, Wo, Cin, Cout)
    g = jnp.where(valid[None, :, :, None, None], g, 0.0)
    rhs = jnp.transpose(g, (0, 1, 3, 2, 4)).reshape(KH * Wp * Cin, Ncols)
    if Ncols_pad != Ncols:
        rhs = jnp.pad(rhs, ((0, 0), (0, Ncols_pad - Ncols)))

    b_row = jnp.tile(b, Wo)
    if Ncols_pad != Ncols:
        b_row = jnp.pad(b_row, (0, Ncols_pad - Ncols))
    b_row = b_row.reshape(1, Ncols_pad)

    return jax.device_put(rhs), jax.device_put(b_row)


# ----------------------------------------------------------------------------
# Per-call forward pass (single jit region: layout plumbing + pallas_call).
# ----------------------------------------------------------------------------
@functools.partial(
    jax.jit,
    static_argnames=("kernel_size", "stride", "padding", "out_channels",
                     "activation"))
def conv2d_block_apply(x_nchw, rhs, b_row, *, kernel_size, stride, padding,
                       out_channels, activation="relu"):
    """Pallas implementation of Conv2dBlock.forward (norm='none').

    NOTE: if the surrounding model can stay NHWC, the leading/trailing
    transposes can be dropped; they are kept here to match the PyTorch NCHW
    interface and are fused under this jit.
    """
    N, Cin, H, W = x_nchw.shape
    KH = KW = kernel_size
    Cout = out_channels
    Hp, Wp = H + 2 * padding, W + 2 * padding
    Ho = (Hp - KH) // stride + 1
    Wo = (Wp - KW) // stride + 1
    Ncols = Wo * Cout
    Ncols_pad = ((Ncols + 127) // 128) * 128
    Kdim = KH * Wp * Cin
    assert rhs.shape == (Kdim, Ncols_pad), (rhs.shape, (Kdim, Ncols_pad))
    assert b_row.shape == (1, Ncols_pad)

    # --- layout plumbing (fused under jit, no per-op dispatches) ------------
    x = jnp.transpose(x_nchw, (0, 2, 3, 1))                    # NHWC
    xp = jnp.pad(x, ((0, 0), (padding, padding), (padding, padding), (0, 0)))
    # lhs[(n, ho), (kh, wp, ci)] = xp[n, ho*stride + kh, wp, ci]
    rows = jnp.stack(
        [xp[:, kh:kh + stride * (Ho - 1) + 1:stride, :, :] for kh in range(KH)],
        axis=2)                                                # (N, Ho, KH, Wp, Cin)
    lhs = rows.reshape(N * Ho, Kdim)

    M = N * Ho
    M_pad = ((M + 7) // 8) * 8                                 # sublane-align rows
    if M_pad != M:
        lhs = jnp.pad(lhs, ((0, M_pad - M), (0, 0)))

    flops = 2 * M_pad * Kdim * Ncols_pad
    bytes_accessed = 4 * (M_pad * Kdim + Kdim * Ncols_pad
                          + Ncols_pad + M_pad * Ncols_pad)
    transcendentals = M_pad * Ncols_pad if activation == "tanh" else 0
    cost = pl.CostEstimate(flops=flops, transcendentals=transcendentals,
                           bytes_accessed=bytes_accessed)

    kernel = functools.partial(_conv2d_block_kernel, activation=activation)
    out_dtype = x_nchw.dtype

    ROW_TILE = 256
    if M_pad % ROW_TILE == 0 and M_pad // ROW_TILE >= 2:
        # Large-M path: shard row tiles across TensorCores (v7x megacore) and
        # keep per-step VMEM bounded; each step is an independent matmul.
        out = pl.pallas_call(
            kernel,
            out_shape=jax.ShapeDtypeStruct((M_pad, Ncols_pad), out_dtype),
            grid=(M_pad // ROW_TILE,),
            in_specs=[
                pl.BlockSpec((ROW_TILE, Kdim), lambda i: (i, 0)),
                pl.BlockSpec((Kdim, Ncols_pad), lambda i: (0, 0)),
                pl.BlockSpec((1, Ncols_pad), lambda i: (0, 0)),
            ],
            out_specs=pl.BlockSpec((ROW_TILE, Ncols_pad), lambda i: (i, 0)),
            compiler_params=pltpu.CompilerParams(
                dimension_semantics=("parallel",),
                vmem_limit_bytes=64 * 1024 * 1024),
            cost_estimate=cost,
        )(lhs, rhs, b_row)
    else:
        # Small-M path (demo size): grid-less single call, everything in VMEM.
        out = pl.pallas_call(
            kernel,
            out_shape=jax.ShapeDtypeStruct((M_pad, Ncols_pad), out_dtype),
            in_specs=[
                pl.BlockSpec(memory_space=pltpu.MemorySpace.VMEM),
                pl.BlockSpec(memory_space=pltpu.MemorySpace.VMEM),
                pl.BlockSpec(memory_space=pltpu.MemorySpace.VMEM),
            ],
            out_specs=pl.BlockSpec(memory_space=pltpu.MemorySpace.VMEM),
            cost_estimate=cost,
        )(lhs, rhs, b_row)

    # (M, Wo*Cout) is a pure reshape of (N, Ho, Wo, Cout) -> back to NCHW.
    out = out[:M, :Ncols].reshape(N, Ho, Wo, Cout)
    return jnp.transpose(out, (0, 3, 1, 2))


if __name__ == "__main__":
    # Module hyperparams: Conv2dBlock(4, 8, 3, 1, padding=1,
    #                                 norm='none', activation='relu',
    #                                 pad_type='zero')
    INPUT_DIM, OUTPUT_DIM, K, STRIDE, PAD = 4, 8, 3, 1, 1
    N, H, W = 2, 16, 16

    key = jax.random.PRNGKey(0)
    k_w, k_b, k_x = jax.random.split(key, 3)
    # Deterministic synthetic parameters (PyTorch Conv2d weight layout OIHW).
    w = 0.1 * jax.random.normal(k_w, (OUTPUT_DIM, INPUT_DIM, K, K), jnp.float32)
    b = 0.1 * jax.random.normal(k_b, (OUTPUT_DIM,), jnp.float32)
    x = jax.random.normal(k_x, (N, INPUT_DIM, H, W), jnp.float32)

    # One-time (per weight update) prep: Toeplitz RHS + tiled bias row.
    rhs, b_row = build_conv2d_block_params(
        w, b, input_hw=(H, W), stride=STRIDE, padding=PAD,
        norm="none", pad_type="zero")

    # Per-call forward (single jit region containing the pallas_call).
    y = conv2d_block_apply(x, rhs, b_row, kernel_size=K, stride=STRIDE,
                           padding=PAD, out_channels=OUTPUT_DIM,
                           activation="relu")
    y = jax.block_until_ready(y)

    # Reference: XLA conv + bias + ReLU (matches nn.Conv2d(...,bias=True)+ReLU).
    ref = lax.conv_general_dilated(
        x, w, window_strides=(STRIDE, STRIDE),
        padding=[(PAD, PAD), (PAD, PAD)],
        dimension_numbers=("NCHW", "OIHW", "NCHW"))
    ref = jax.nn.relu(ref + b[None, :, None, None])

    assert y.shape == ref.shape, (y.shape, ref.shape)
    err = float(jnp.max(jnp.abs(y - ref)))
    assert err < 1e-4, f"max abs error {err}"
    print("KERNEL_OK")
</pallas_src>

<mosaic_0001>
module attributes {stable_mosaic.version = 11 : i64} {
  func.func @_conv2d_block_kernel(%arg0: memref<32x216xf32, #tpu.memory_space<vmem>>, %arg1: memref<216x128xf32, #tpu.memory_space<vmem>>, %arg2: memref<1x128xf32, #tpu.memory_space<vmem>>, %arg3: memref<32x128xf32, #tpu.memory_space<vmem>>) attributes {dimension_semantics = [], scalar_prefetch = 0 : i64, scratch_operands = 0 : i64, tpu.core_type = #tpu.core_type<tc>} {
    %c0 = arith.constant 0 : index
    %c0_0 = arith.constant 0 : index
    %0 = vector.load %arg0[%c0, %c0_0] : memref<32x216xf32, #tpu.memory_space<vmem>>, vector<32x216xf32>
    %c0_1 = arith.constant 0 : index
    %c0_2 = arith.constant 0 : index
    %1 = vector.load %arg1[%c0_1, %c0_2] : memref<216x128xf32, #tpu.memory_space<vmem>>, vector<216x128xf32>
    %cst = arith.constant dense<0.000000e+00> : vector<32x128xf32>
    %2 = tpu.matmul %0, %1, %cst {dimension_numbers = #tpu.dot_dimension_numbers<[1], [0], [0], [1], [0, 0, 1, 1], [], []>} : vector<32x216xf32>, vector<216x128xf32>, vector<32x128xf32> -> vector<32x128xf32>
    %c0_3 = arith.constant 0 : index
    %c0_4 = arith.constant 0 : index
    %3 = vector.load %arg2[%c0_3, %c0_4] : memref<1x128xf32, #tpu.memory_space<vmem>>, vector<1x128xf32>
    %4 = vector.broadcast %3 : vector<1x128xf32> to vector<32x128xf32>
    %5 = arith.addf %2, %4 : vector<32x128xf32>
    %cst_5 = arith.constant 0.000000e+00 : f32
    %6 = vector.broadcast %cst_5 : f32 to vector<32x128xf32>
    %7 = arith.maximumf %5, %6 : vector<32x128xf32>
    %c0_6 = arith.constant 0 : index
    %c0_7 = arith.constant 0 : index
    %8 = vector.load %arg3[%c0_6, %c0_7] : memref<32x128xf32, #tpu.memory_space<vmem>>, vector<32x128xf32>
    tpu.vector_store %arg3[%c0_6, %c0_7], %7 {strides = array<i32>} : memref<32x128xf32, #tpu.memory_space<vmem>>, vector<32x128xf32>,
    return
  }
}

</mosaic_0001>

<llo_original>
// kernel: conv2d_block_apply.1
$region0: #{conv2d_block_apply.1}
  #allocation0 [shape = 'u32[]', space=smem, size = 0x4, offset = 0x4, fixed_abs, tag = 'smem constant byte address 0x4 - core index']
  #allocation1 [shape = 'u32[72,128]{1,0:T(1,128)}', space=vmem, size = 0x9000, scoped, tag = 'internal scratch']
  %s0 = inlined_call_operand.vmem [shape: f32[32,216], index: 0, kind: input, shape index: {}]
  %s1 = inlined_call_operand.vmem [shape: f32[216,128], index: 1, kind: input, shape index: {}]
  %s2 = inlined_call_operand.vmem [shape: f32[1,128], index: 2, kind: input, shape index: {}]
  %s3 = inlined_call_operand.vmem [shape: f32[32,128], index: 3, kind: output, shape index: {}]
  %s4 = sld [smem:[#allocation0]]
  $region22: #{conv2d_block_apply.1} parent=0
    _
  %s6 = ssub.s32 1, %s4
  %s7 = scalar_select 0, %s6, %s4
  // Predicated region
  $region2: #{conv2d_block_apply.1} parent=0 // pred_check
    _
  $region3: #{conv2d_block_apply.1} parent=0 // pred_check_branch
    %9 = sbr.rel (0) target = $region5
  $region4: #{conv2d_block_apply.1} parent=0 // pred_region
    _
  $region5: #{conv2d_block_apply.1} parent=0 // pred_fallthru
    _
  // Predicated region
  $region6: #{conv2d_block_apply.1} parent=0 // pred_check
    _
  $region7: #{conv2d_block_apply.1} parent=0 // pred_check_branch
    %11 = sbr.rel (0) target = $region9
  $region8: #{conv2d_block_apply.1} parent=0 // pred_region
    _
  $region9: #{conv2d_block_apply.1} parent=0 // pred_fallthru
    _
  // Predicated region
  $region10: #{conv2d_block_apply.1} parent=0 // pred_check
    _
  $region11: #{conv2d_block_apply.1} parent=0 // pred_check_branch
    %13 = sbr.rel (0) target = $region13
  $region12: #{conv2d_block_apply.1} parent=0 // pred_region
    _
  $region13: #{conv2d_block_apply.1} parent=0 // pred_fallthru
    _
  %v14 = vld [vmem:[%s0] sm:$0xff]
  %v15 = vld [vmem:[%s0 + $0x8] sm:$0xff]
  %v16 = vld [vmem:[%s0 + $0x10] sm:$0xff]
  %v17 = vld [vmem:[%s0 + $0x18] sm:$0xff]
  %v18 = vld [vmem:[%s0 + $0x20] sm:$0xff]
  %v19 = vld [vmem:[%s0 + $0x28] sm:$0xff]
  %v20 = vld [vmem:[%s0 + $0x30] sm:$0xff]
  %v21 = vld [vmem:[%s0 + $0x38] sm:$0xff]
  %v22 = vld [vmem:[%s1] sm:$0xff]
  %v23 = vld [vmem:[%s1 + $0x8] sm:$0xff]
  %v24 = vld [vmem:[%s1 + $0x10] sm:$0xff]
  %v25 = vld [vmem:[%s1 + $0x18] sm:$0xff]
  %v26 = vld [vmem:[%s1 + $0x20] sm:$0xff]
  %v27 = vld [vmem:[%s1 + $0x28] sm:$0xff]
  %v28 = vld [vmem:[%s1 + $0x30] sm:$0xff]
  %v29 = vld [vmem:[%s1 + $0x38] sm:$0xff]
  %v30 = vld [vmem:[%s1 + $0x40] sm:$0xff]
  %v31 = vld [vmem:[%s1 + $0x48] sm:$0xff]
  %v32 = vld [vmem:[%s1 + $0x50] sm:$0xff]
  %v33 = vld [vmem:[%s1 + $0x58] sm:$0xff]
  %v34 = vld [vmem:[%s1 + $0x60] sm:$0xff]
  %v35 = vld [vmem:[%s1 + $0x68] sm:$0xff]
  %v36 = vld [vmem:[%s1 + $0x70] sm:$0xff]
  %v37 = vld [vmem:[%s1 + $0x78] sm:$0xff]
  %v38 = vld [vmem:[%s1 + $0x80] sm:$0xff]
  %v39 = vld [vmem:[%s1 + $0x88] sm:$0xff]
  %v40 = vld [vmem:[%s1 + $0x90] sm:$0xff]
  %v41 = vld [vmem:[%s1 + $0x98] sm:$0xff]
  %v42 = vld [vmem:[%s1 + $0xa0] sm:$0xff]
  %v43 = vld [vmem:[%s1 + $0xa8] sm:$0xff]
  %v44 = vld [vmem:[%s1 + $0xb0] sm:$0xff]
  %v45 = vld [vmem:[%s1 + $0xb8] sm:$0xff]
  %v46 = vld [vmem:[%s1 + $0xc0] sm:$0xff]
  %v47 = vld [vmem:[%s1 + $0xc8] sm:$0xff]
  %v48 = vld [vmem:[%s1 + $0xd0] sm:$0xff]
  %v49 = vld [vmem:[%s2] sm:$0x1]
  %v51 = vperm.slane %v49, 0
  %vm53 = vcmask 719872
  %v55 = vsel %vm53, %v15, 0
  %v58 = vsel %vm53, %v17, 0
  %v61 = vsel %vm53, %v19, 0
  %v64 = vsel %vm53, %v21, 0
  %66 = vmatpush.msra.mxu0 %v37
  %67 = vmatpush.msra.mxu0 %v36
  %68 = vmatpush.msra.mxu0 %v35
  %69 = vmatpush.msra.mxu0 %v34
  %70 = vmatpush.msra.mxu0 %v33
  %71 = vmatpush.msra.mxu0 %v32
  %72 = vmatpush.msra.mxu0 %v31
  %73 = vmatpush.msra.mxu0 %v30
  %74 = vmatpush.msra.mxu0 %v29
  %75 = vmatpush.msra.mxu0 %v28
  %76 = vmatpush.msra.mxu0 %v27
  %77 = vmatpush.msra.mxu0 %v26
  %78 = vmatpush.msra.mxu0 %v25
  %79 = vmatpush.msra.mxu0 %v24
  %80 = vmatpush.msra.mxu0 %v23
  %81 = vmatpush.msra.mxu0 %v22
  %82 = vmatmul.f32.gmra.mxu0 %v14
  %v83 = vpop.f32.mrf.mxu0
  %v84 = vadd.f32 %v51, %v83
  %85 = vmatmul.f32.gmra.mxu0 %v16
  %v86 = vpop.f32.mrf.mxu0
  %v87 = vadd.f32 %v51, %v86
  %88 = vmatmul.f32.gmra.mxu0 %v18
  %v89 = vpop.f32.mrf.mxu0
  %v90 = vadd.f32 %v51, %v89
  %91 = vmatmul.f32.gmra.mxu0 %v20
  %v92 = vpop.f32.mrf.mxu0
  %v93 = vadd.f32 %v51, %v92
  %94 = vdwg.mxu0
  %95 = vmatpush.msra.mxu0 0.0
  %96 = vmatpush.msra.mxu0 0.0
  %97 = vmatpush.msra.mxu0 0.0
  %98 = vmatpush.msra.mxu0 0.0
  %99 = vmatpush.msra.mxu0 0.0
  %100 = vmatpush.msra.mxu0 %v48
  %101 = vmatpush.msra.mxu0 %v47
  %102 = vmatpush.msra.mxu0 %v46
  %103 = vmatpush.msra.mxu0 %v45
  %104 = vmatpush.msra.mxu0 %v44
  %105 = vmatpush.msra.mxu0 %v43
  %106 = vmatpush.msra.mxu0 %v42
  %107 = vmatpush.msra.mxu0 %v41
  %108 = vmatpush.msra.mxu0 %v40
  %109 = vmatpush.msra.mxu0 %v39
  %110 = vmatpush.msra.mxu0 %v38
  %111 = vmatmul.f32.gmra.mxu0 %v55
  %v112 = vpop.f32.mrf.mxu0
  %v113 = vadd.f32 %v84, %v112
  %114 = vmatmul.f32.gmra.mxu0 %v58
  %v115 = vpop.f32.mrf.mxu0
  %v116 = vadd.f32 %v87, %v115
  %117 = vmatmul.f32.gmra.mxu0 %v61
  %v118 = vpop.f32.mrf.mxu0
  %v119 = vadd.f32 %v90, %v118
  %120 = vmatmul.f32.gmra.mxu0 %v64
  %v121 = vpop.f32.mrf.mxu0
  %v122 = vadd.f32 %v93, %v121
  %123 = vdwg.mxu0
  %v124 = vmax.f32 %v113, 0.0
  %v125 = vmax.f32 %v116, 0.0
  %v126 = vmax.f32 %v119, 0.0
  %v127 = vmax.f32 %v122, 0.0
  %128 = vst [vmem:[%s3] sm:$0xff] %v124
  %129 = vst [vmem:[%s3 + $0x8] sm:$0xff] %v125
  %130 = vst [vmem:[%s3 + $0x10] sm:$0xff] %v126
  %131 = vst [vmem:[%s3 + $0x18] sm:$0xff] %v127
  // Predicated region
  $region14: #{conv2d_block_apply.1} parent=0 // pred_check
    _
  $region15: #{conv2d_block_apply.1} parent=0 // pred_check_branch
    %133 = sbr.rel (0) target = $region17
  $region16: #{conv2d_block_apply.1} parent=0 // pred_region
    _
  $region17: #{conv2d_block_apply.1} parent=0 // pred_fallthru
    _
  // Predicated region
  $region18: #{conv2d_block_apply.1} parent=0 // pred_check
    _
  $region19: #{conv2d_block_apply.1} parent=0 // pred_check_branch
    %135 = sbr.rel (0) target = $region21
  $region20: #{conv2d_block_apply.1} parent=0 // pred_region
    _
  $region21: #{conv2d_block_apply.1} parent=0 // pred_fallthru
    _

</llo_original>
